<compile_context>
chip_gen: v5e
topology: v5e:2x2
jax: 0.10.0
libtpu: 0.0.40
codegen_flags: <defaults>
</compile_context>

<pallas_src>
import jax
import jax.numpy as jnp
from jax.experimental import pallas as pl
from jax.experimental.pallas import tpu as pltpu

INPUT_SIZE = 784
HIDDEN_SIZE = 100
NUM_CLASSES = 2

# Lane-padded sizes (multiples of 128).
K_PAD = 896   # 7 * 128  (input features)
H_PAD = 128   # hidden units
C_PAD = 128   # output classes

MAX_TILE_B = 256  # target M >= 256 rows/step on large batches (MXU fill)


def _round_up(x, m):
    return ((x + m - 1) // m) * m


def mlp_kernel(x_ref, w1_ref, b1_ref, w2_ref, b2_ref, out_ref):
    # Layer 1: (TILE_B, 896) @ (896, 128) + (1, 128), fused bias + ReLU on VPU.
    h = jnp.dot(x_ref[...], w1_ref[...], preferred_element_type=jnp.float32)
    h = jnp.maximum(h + b1_ref[...], 0.0)
    # Layer 2: (TILE_B, 128) @ (128, 128) + (1, 128). Output is already f32.
    out_ref[...] = (
        jnp.dot(h, w2_ref[...], preferred_element_type=jnp.float32) + b2_ref[...]
    )


def neural_net_forward(x, w1, b1, w2, b2):
    """x: (B, 784); w1: (784, 100); b1: (1, 100); w2: (100, 2); b2: (1, 2)."""
    B = x.shape[0]

    # Pick a batch tile: multiple of 8, capped at MAX_TILE_B; pad B to a multiple.
    tile_b = min(MAX_TILE_B, _round_up(B, 8))
    b_pad = _round_up(B, tile_b)

    # Zero-pad everything to lane-dense shapes (padded lanes contribute exactly 0).
    x_p = jnp.pad(x, ((0, b_pad - B), (0, K_PAD - INPUT_SIZE)))
    w1_p = jnp.pad(w1, ((0, K_PAD - INPUT_SIZE), (0, H_PAD - HIDDEN_SIZE)))
    b1_p = jnp.pad(b1, ((0, 0), (0, H_PAD - HIDDEN_SIZE)))
    w2_p = jnp.pad(w2, ((0, H_PAD - HIDDEN_SIZE), (0, C_PAD - NUM_CLASSES)))
    b2_p = jnp.pad(b2, ((0, 0), (0, C_PAD - NUM_CLASSES)))

    out_padded = pl.pallas_call(
        mlp_kernel,
        out_shape=jax.ShapeDtypeStruct((b_pad, C_PAD), jnp.float32),
        grid=(b_pad // tile_b,),
        in_specs=[
            # x: tiled along batch, double-buffered by the Pallas pipeline.
            pl.BlockSpec((tile_b, K_PAD), lambda i: (i, 0)),
            # Weights / biases: constant index_map -> fetched once, VMEM-resident.
            pl.BlockSpec((K_PAD, H_PAD), lambda i: (0, 0)),
            pl.BlockSpec((1, H_PAD), lambda i: (0, 0)),
            pl.BlockSpec((H_PAD, C_PAD), lambda i: (0, 0)),
            pl.BlockSpec((1, C_PAD), lambda i: (0, 0)),
        ],
        out_specs=pl.BlockSpec((tile_b, C_PAD), lambda i: (i, 0)),
        compiler_params=pltpu.CompilerParams(
            dimension_semantics=("parallel",),
        ),
    )(x_p, w1_p, b1_p, w2_p, b2_p)

    # Slice back to the logical (B, 2) output.
    return out_padded[:B, :NUM_CLASSES]


def init_params(key):
    # Deterministic init mimicking nn.Linear's uniform(-1/sqrt(fan_in), 1/sqrt(fan_in)).
    k1, k2, k3, k4 = jax.random.split(key, 4)
    bound1 = 1.0 / jnp.sqrt(INPUT_SIZE)
    bound2 = 1.0 / jnp.sqrt(HIDDEN_SIZE)
    # Stored as (in, out) so the kernel does x @ W (equivalent to PyTorch x @ W^T).
    w1 = jax.random.uniform(k1, (INPUT_SIZE, HIDDEN_SIZE), jnp.float32, -bound1, bound1)
    b1 = jax.random.uniform(k2, (1, HIDDEN_SIZE), jnp.float32, -bound1, bound1)
    w2 = jax.random.uniform(k3, (HIDDEN_SIZE, NUM_CLASSES), jnp.float32, -bound2, bound2)
    b2 = jax.random.uniform(k4, (1, NUM_CLASSES), jnp.float32, -bound2, bound2)
    return w1, b1, w2, b2


if __name__ == "__main__":
    key = jax.random.PRNGKey(0)
    kx, kp = jax.random.split(key)
    B = 8
    x = jax.random.normal(kx, (B, INPUT_SIZE), dtype=jnp.float32)
    w1, b1, w2, b2 = init_params(kp)

    out = neural_net_forward(x, w1, b1, w2, b2)
    out = jax.block_until_ready(out)

    # Reference check in plain JAX (unpadded math).
    ref = jnp.maximum(x @ w1 + b1, 0.0) @ w2 + b2
    assert out.shape == (B, NUM_CLASSES)
    assert jnp.allclose(out, ref, atol=1e-4, rtol=1e-4)

    print("KERNEL_OK")
</pallas_src>

<mosaic_0001>
module attributes {stable_mosaic.version = 11 : i64} {
  func.func @mlp_kernel(%arg0: i32, %arg1: memref<8x896xf32, #tpu.memory_space<vmem>>, %arg2: memref<896x128xf32, #tpu.memory_space<vmem>>, %arg3: memref<1x128xf32, #tpu.memory_space<vmem>>, %arg4: memref<128x128xf32, #tpu.memory_space<vmem>>, %arg5: memref<1x128xf32, #tpu.memory_space<vmem>>, %arg6: memref<8x128xf32, #tpu.memory_space<vmem>>) attributes {dimension_semantics = [#tpu.dimension_semantics<parallel>], iteration_bounds = array<i64: 1>, scalar_prefetch = 0 : i64, scratch_operands = 0 : i64, tpu.core_type = #tpu.core_type<tc>, window_params = [{transform_indices = @transform_0, window_bounds = array<i64: 8, 896>}, {pipeline_mode = #tpu.pipeline_mode<synchronous>, transform_indices = @transform_1, window_bounds = array<i64: 896, 128>}, {pipeline_mode = #tpu.pipeline_mode<synchronous>, transform_indices = @transform_2, window_bounds = array<i64: 1, 128>}, {pipeline_mode = #tpu.pipeline_mode<synchronous>, transform_indices = @transform_3, window_bounds = array<i64: 128, 128>}, {pipeline_mode = #tpu.pipeline_mode<synchronous>, transform_indices = @transform_4, window_bounds = array<i64: 1, 128>}, {transform_indices = @transform_5, window_bounds = array<i64: 8, 128>}]} {
    %c0 = arith.constant 0 : index
    %c0_0 = arith.constant 0 : index
    %0 = vector.load %arg1[%c0, %c0_0] : memref<8x896xf32, #tpu.memory_space<vmem>>, vector<8x896xf32>
    %c0_1 = arith.constant 0 : index
    %c0_2 = arith.constant 0 : index
    %1 = vector.load %arg2[%c0_1, %c0_2] : memref<896x128xf32, #tpu.memory_space<vmem>>, vector<896x128xf32>
    %cst = arith.constant dense<0.000000e+00> : vector<8x128xf32>
    %2 = tpu.matmul %0, %1, %cst {dimension_numbers = #tpu.dot_dimension_numbers<[1], [0], [0], [1], [0, 0, 1, 1], [], []>} : vector<8x896xf32>, vector<896x128xf32>, vector<8x128xf32> -> vector<8x128xf32>
    %c0_3 = arith.constant 0 : index
    %c0_4 = arith.constant 0 : index
    %3 = vector.load %arg3[%c0_3, %c0_4] : memref<1x128xf32, #tpu.memory_space<vmem>>, vector<1x128xf32>
    %4 = vector.broadcast %3 : vector<1x128xf32> to vector<8x128xf32>
    %5 = arith.addf %2, %4 : vector<8x128xf32>
    %cst_5 = arith.constant 0.000000e+00 : f32
    %6 = vector.broadcast %cst_5 : f32 to vector<8x128xf32>
    %7 = arith.maximumf %5, %6 : vector<8x128xf32>
    %c0_6 = arith.constant 0 : index
    %c0_7 = arith.constant 0 : index
    %8 = vector.load %arg4[%c0_6, %c0_7] : memref<128x128xf32, #tpu.memory_space<vmem>>, vector<128x128xf32>
    %cst_8 = arith.constant dense<0.000000e+00> : vector<8x128xf32>
    %9 = tpu.matmul %7, %8, %cst_8 {dimension_numbers = #tpu.dot_dimension_numbers<[1], [0], [0], [1], [0, 0, 1, 1], [], []>} : vector<8x128xf32>, vector<128x128xf32>, vector<8x128xf32> -> vector<8x128xf32>
    %c0_9 = arith.constant 0 : index
    %c0_10 = arith.constant 0 : index
    %10 = vector.load %arg5[%c0_9, %c0_10] : memref<1x128xf32, #tpu.memory_space<vmem>>, vector<1x128xf32>
    %11 = vector.broadcast %10 : vector<1x128xf32> to vector<8x128xf32>
    %12 = arith.addf %9, %11 : vector<8x128xf32>
    %c0_11 = arith.constant 0 : index
    %c0_12 = arith.constant 0 : index
    %13 = vector.load %arg6[%c0_11, %c0_12] : memref<8x128xf32, #tpu.memory_space<vmem>>, vector<8x128xf32>
    tpu.vector_store %arg6[%c0_11, %c0_12], %12 {strides = array<i32>} : memref<8x128xf32, #tpu.memory_space<vmem>>, vector<8x128xf32>,
    return
  }
  func.func @transform_0(%arg0: i32) -> (i32, i32) {
    %c0_i32 = arith.constant 0 : i32
    %c0_i32_0 = arith.constant 0 : i32
    return %arg0, %c0_i32 : i32, i32
  }
  func.func @transform_1(%arg0: i32) -> (i32, i32) {
    %c0_i32 = arith.constant 0 : i32
    %c0_i32_0 = arith.constant 0 : i32
    %c0_i32_1 = arith.constant 0 : i32
    return %c0_i32, %c0_i32_0 : i32, i32
  }
  func.func @transform_2(%arg0: i32) -> (i32, i32) {
    %c0_i32 = arith.constant 0 : i32
    %c0_i32_0 = arith.constant 0 : i32
    %c0_i32_1 = arith.constant 0 : i32
    return %c0_i32, %c0_i32_0 : i32, i32
  }
  func.func @transform_3(%arg0: i32) -> (i32, i32) {
    %c0_i32 = arith.constant 0 : i32
    %c0_i32_0 = arith.constant 0 : i32
    %c0_i32_1 = arith.constant 0 : i32
    return %c0_i32, %c0_i32_0 : i32, i32
  }
  func.func @transform_4(%arg0: i32) -> (i32, i32) {
    %c0_i32 = arith.constant 0 : i32
    %c0_i32_0 = arith.constant 0 : i32
    %c0_i32_1 = arith.constant 0 : i32
    return %c0_i32, %c0_i32_0 : i32, i32
  }
  func.func @transform_5(%arg0: i32) -> (i32, i32) {
    %c0_i32 = arith.constant 0 : i32
    %c0_i32_0 = arith.constant 0 : i32
    return %arg0, %c0_i32 : i32, i32
  }
}

</mosaic_0001>

<llo_original>
// kernel: tpu_custom_call.1
$region0: #{tpu_custom_call.1}
  #allocation0 [shape = 'u32[]', space=smem, size = 0x4, offset = 0x4, fixed_abs, tag = 'smem constant byte address 0x4 - core index']
  #allocation1 [shape = 'u32[72,128]{1,0:T(1,128)}', space=vmem, size = 0x9000, scoped, tag = 'internal scratch']
  %s0 = inlined_call_operand.hbm [shape: f32[8,896], index: 0, kind: input, shape index: {}]
  %s1 = inlined_call_operand.hbm [shape: f32[896,128], index: 1, kind: input, shape index: {}]
  %s2 = inlined_call_operand.vmem [shape: f32[1,128], index: 2, kind: input, shape index: {}]
  %s3 = inlined_call_operand.hbm [shape: f32[128,128], index: 3, kind: input, shape index: {}]
  %s4 = inlined_call_operand.vmem [shape: f32[1,128], index: 4, kind: input, shape index: {}]
  %s5 = inlined_call_operand.hbm [shape: f32[8,128], index: 5, kind: output, shape index: {}]
  %s6 = sld [smem:[#allocation0]]
  $region42: #{tpu_custom_call.1} parent=0
    _
  %s8 = ssub.s32 1, %s6
  %s9 = scalar_select 0, %s8, %s6
  $region1: #{tpu_custom_call.1} parent=0
    #allocation2 [shape = 'u8[28672]{0}', space=vmem, size = 0x7000, scoped, tag = 'input window, operand 0, single buffered']
    #allocation3 [shape = 's32[1]{0}', space=sflag, size = 0x4, scoped, tag = 'scoped memory for tpu_custom_call.1']
    #allocation4 [shape = 's32[1]{0}', space=sflag, size = 0x4, scoped, tag = 'scoped memory for tpu_custom_call.1']
    #allocation5 [shape = 'u8[458752]{0}', space=vmem, size = 0x70000, scoped, tag = 'input window, operand 1, single buffered']
    #allocation6 [shape = 's32[1]{0}', space=sflag, size = 0x4, scoped, tag = 'scoped memory for tpu_custom_call.1']
    #allocation7 [shape = 'u8[65536]{0}', space=vmem, size = 0x10000, scoped, tag = 'input window, operand 3, single buffered']
    #allocation8 [shape = 'u8[4096]{0}', space=vmem, size = 0x1000, scoped, tag = 'output window, operand 0, single buffered']
    %10 = vsyncpa [#allocation3], 0
    %11 = vsyncpa [#allocation6], 0
    %12 = vsyncpa [#allocation4], 0
    // Predicated region
    $region2: #{tpu_custom_call.1} parent=1 // pred_check
      _
    $region3: #{tpu_custom_call.1} parent=1 // pred_check_branch
      %14 = sbr.rel (0) target = $region5
    $region4: #{tpu_custom_call.1} parent=1 // pred_region
      %16 = vsyncadd [#allocation3], 0
      %s18 = sshll.u32 %s0, 4
      %s19 = int_to_ptr.hbm [resolvable:$true] %s18
      %s20 = sshll.u32 [#allocation2], 4
      %s21 = int_to_ptr.vmem [resolvable:$true] %s20
      %23 = dma.hbm_to_vmem [thread:$0]  %s19, 896, %s21, [#allocation3]
    $region5: #{tpu_custom_call.1} parent=1 // pred_fallthru
      _
    // Predicated region
    $region6: #{tpu_custom_call.1} parent=1 // pred_check
      _
    $region7: #{tpu_custom_call.1} parent=1 // pred_check_branch
      %25 = sbr.rel (0) target = $region9
    $region8: #{tpu_custom_call.1} parent=1 // pred_region
      %27 = vsyncadd [#allocation6], 0
      %s28 = sshll.u32 %s1, 4
      %s29 = int_to_ptr.hbm [resolvable:$true] %s28
      %s30 = sshll.u32 [#allocation5], 4
      %s31 = int_to_ptr.vmem [resolvable:$true] %s30
      %36 = dma.hbm_to_vmem [thread:$0]  %s29, 14336, %s31, [#allocation6], 128, 128, 8
    $region9: #{tpu_custom_call.1} parent=1 // pred_fallthru
      _
    // Predicated region
    $region10: #{tpu_custom_call.1} parent=1 // pred_check
      _
    $region11: #{tpu_custom_call.1} parent=1 // pred_check_branch
      %38 = sbr.rel (0) target = $region13
    $region12: #{tpu_custom_call.1} parent=1 // pred_region
      _
    $region13: #{tpu_custom_call.1} parent=1 // pred_fallthru
      _
    // Predicated region
    $region14: #{tpu_custom_call.1} parent=1 // pred_check
      _
    $region15: #{tpu_custom_call.1} parent=1 // pred_check_branch
      %40 = sbr.rel (0) target = $region17
    $region16: #{tpu_custom_call.1} parent=1 // pred_region
      %42 = vsyncadd [#allocation6], 0
      %s43 = sshll.u32 %s3, 4
      %s44 = int_to_ptr.hbm [resolvable:$true] %s43
      %s45 = sshll.u32 [#allocation7], 4
      %s46 = int_to_ptr.vmem [resolvable:$true] %s45
      %51 = dma.hbm_to_vmem [thread:$0]  %s44, 2048, %s46, [#allocation6], 128, 128, 8
    $region17: #{tpu_custom_call.1} parent=1 // pred_fallthru
      _
    // Predicated region
    $region18: #{tpu_custom_call.1} parent=1 // pred_check
      _
    $region19: #{tpu_custom_call.1} parent=1 // pred_check_branch
      %53 = sbr.rel (0) target = $region21
    $region20: #{tpu_custom_call.1} parent=1 // pred_region
      _
    $region21: #{tpu_custom_call.1} parent=1 // pred_fallthru
      _
    // Predicated region
    $region22: #{tpu_custom_call.1} parent=1 // pred_check
      _
    $region23: #{tpu_custom_call.1} parent=1 // pred_check_branch
      %55 = sbr.rel (0) target = $region25
    $region24: #{tpu_custom_call.1} parent=1 // pred_region
      %57 = dma.done [#allocation3], 896
    $region25: #{tpu_custom_call.1} parent=1 // pred_fallthru
      _
    // Predicated region
    $region26: #{tpu_custom_call.1} parent=1 // pred_check
      _
    $region27: #{tpu_custom_call.1} parent=1 // pred_check_branch
      %59 = sbr.rel (0) target = $region29
    $region28: #{tpu_custom_call.1} parent=1 // pred_region
      %61 = dma.done [#allocation6], 14336
    $region29: #{tpu_custom_call.1} parent=1 // pred_fallthru
      _
    // Predicated region
    $region30: #{tpu_custom_call.1} parent=1 // pred_check
      _
    $region31: #{tpu_custom_call.1} parent=1 // pred_check_branch
      %63 = sbr.rel (0) target = $region33
    $region32: #{tpu_custom_call.1} parent=1 // pred_region
      %65 = dma.done [#allocation6], 2048
    $region33: #{tpu_custom_call.1} parent=1 // pred_fallthru
      _
    %v66 = vld [vmem:[#allocation2] sm:$0xff]
    %v67 = vld [vmem:[#allocation2 + $0x8] sm:$0xff]
    %v68 = vld [vmem:[#allocation2 + $0x10] sm:$0xff]
    %v69 = vld [vmem:[#allocation2 + $0x18] sm:$0xff]
    %v70 = vld [vmem:[#allocation2 + $0x20] sm:$0xff]
    %v71 = vld [vmem:[#allocation2 + $0x28] sm:$0xff]
    %v72 = vld [vmem:[#allocation2 + $0x30] sm:$0xff]
    %v73 = vld [vmem:[#allocation5] sm:$0xff]
    %v74 = vld [vmem:[#allocation5 + $0x8] sm:$0xff]
    %v75 = vld [vmem:[#allocation5 + $0x10] sm:$0xff]
    %v76 = vld [vmem:[#allocation5 + $0x18] sm:$0xff]
    %v77 = vld [vmem:[#allocation5 + $0x20] sm:$0xff]
    %v78 = vld [vmem:[#allocation5 + $0x28] sm:$0xff]
    %v79 = vld [vmem:[#allocation5 + $0x30] sm:$0xff]
    %v80 = vld [vmem:[#allocation5 + $0x38] sm:$0xff]
    %v81 = vld [vmem:[#allocation5 + $0x40] sm:$0xff]
    %v82 = vld [vmem:[#allocation5 + $0x48] sm:$0xff]
    %v83 = vld [vmem:[#allocation5 + $0x50] sm:$0xff]
    %v84 = vld [vmem:[#allocation5 + $0x58] sm:$0xff]
    %v85 = vld [vmem:[#allocation5 + $0x60] sm:$0xff]
    %v86 = vld [vmem:[#allocation5 + $0x68] sm:$0xff]
    %v87 = vld [vmem:[#allocation5 + $0x70] sm:$0xff]
    %v88 = vld [vmem:[#allocation5 + $0x78] sm:$0xff]
    %v89 = vld [vmem:[#allocation5 + $0x80] sm:$0xff]
    %v90 = vld [vmem:[#allocation5 + $0x88] sm:$0xff]
    %v91 = vld [vmem:[#allocation5 + $0x90] sm:$0xff]
    %v92 = vld [vmem:[#allocation5 + $0x98] sm:$0xff]
    %v93 = vld [vmem:[#allocation5 + $0xa0] sm:$0xff]
    %v94 = vld [vmem:[#allocation5 + $0xa8] sm:$0xff]
    %v95 = vld [vmem:[#allocation5 + $0xb0] sm:$0xff]
    %v96 = vld [vmem:[#allocation5 + $0xb8] sm:$0xff]
    %v97 = vld [vmem:[#allocation5 + $0xc0] sm:$0xff]
    %v98 = vld [vmem:[#allocation5 + $0xc8] sm:$0xff]
    %v99 = vld [vmem:[#allocation5 + $0xd0] sm:$0xff]
    %v100 = vld [vmem:[#allocation5 + $0xd8] sm:$0xff]
    %v101 = vld [vmem:[#allocation5 + $0xe0] sm:$0xff]
    %v102 = vld [vmem:[#allocation5 + $0xe8] sm:$0xff]
    %v103 = vld [vmem:[#allocation5 + $0xf0] sm:$0xff]
    %v104 = vld [vmem:[#allocation5 + $0xf8] sm:$0xff]
    %v105 = vld [vmem:[#allocation5 + $0x100] sm:$0xff]
    %v106 = vld [vmem:[#allocation5 + $0x108] sm:$0xff]
    %v107 = vld [vmem:[#allocation5 + $0x110] sm:$0xff]
    %v108 = vld [vmem:[#allocation5 + $0x118] sm:$0xff]
    %v109 = vld [vmem:[#allocation5 + $0x120] sm:$0xff]
    %v110 = vld [vmem:[#allocation5 + $0x128] sm:$0xff]
    %v111 = vld [vmem:[#allocation5 + $0x130] sm:$0xff]
    %v112 = vld [vmem:[#allocation5 + $0x138] sm:$0xff]
    %v113 = vld [vmem:[#allocation5 + $0x140] sm:$0xff]
    %v114 = vld [vmem:[#allocation5 + $0x148] sm:$0xff]
    %v115 = vld [vmem:[#allocation5 + $0x150] sm:$0xff]
    %v116 = vld [vmem:[#allocation5 + $0x158] sm:$0xff]
    %v117 = vld [vmem:[#allocation5 + $0x160] sm:$0xff]
    %v118 = vld [vmem:[#allocation5 + $0x168] sm:$0xff]
    %v119 = vld [vmem:[#allocation5 + $0x170] sm:$0xff]
    %v120 = vld [vmem:[#allocation5 + $0x178] sm:$0xff]
    %v121 = vld [vmem:[#allocation5 + $0x180] sm:$0xff]
    %v122 = vld [vmem:[#allocation5 + $0x188] sm:$0xff]
    %v123 = vld [vmem:[#allocation5 + $0x190] sm:$0xff]
    %v124 = vld [vmem:[#allocation5 + $0x198] sm:$0xff]
    %v125 = vld [vmem:[#allocation5 + $0x1a0] sm:$0xff]
    %v126 = vld [vmem:[#allocation5 + $0x1a8] sm:$0xff]
    %v127 = vld [vmem:[#allocation5 + $0x1b0] sm:$0xff]
    %v128 = vld [vmem:[#allocation5 + $0x1b8] sm:$0xff]
    %v129 = vld [vmem:[#allocation5 + $0x1c0] sm:$0xff]
    %v130 = vld [vmem:[#allocation5 + $0x1c8] sm:$0xff]
    %v131 = vld [vmem:[#allocation5 + $0x1d0] sm:$0xff]
    %v132 = vld [vmem:[#allocation5 + $0x1d8] sm:$0xff]
    %v133 = vld [vmem:[#allocation5 + $0x1e0] sm:$0xff]
    %v134 = vld [vmem:[#allocation5 + $0x1e8] sm:$0xff]
    %v135 = vld [vmem:[#allocation5 + $0x1f0] sm:$0xff]
    %v136 = vld [vmem:[#allocation5 + $0x1f8] sm:$0xff]
    %v137 = vld [vmem:[#allocation5 + $0x200] sm:$0xff]
    %v138 = vld [vmem:[#allocation5 + $0x208] sm:$0xff]
    %v139 = vld [vmem:[#allocation5 + $0x210] sm:$0xff]
    %v140 = vld [vmem:[#allocation5 + $0x218] sm:$0xff]
    %v141 = vld [vmem:[#allocation5 + $0x220] sm:$0xff]
    %v142 = vld [vmem:[#allocation5 + $0x228] sm:$0xff]
    %v143 = vld [vmem:[#allocation5 + $0x230] sm:$0xff]
    %v144 = vld [vmem:[#allocation5 + $0x238] sm:$0xff]
    %v145 = vld [vmem:[#allocation5 + $0x240] sm:$0xff]
    %v146 = vld [vmem:[#allocation5 + $0x248] sm:$0xff]
    %v147 = vld [vmem:[#allocation5 + $0x250] sm:$0xff]
    %v148 = vld [vmem:[#allocation5 + $0x258] sm:$0xff]
    %v149 = vld [vmem:[#allocation5 + $0x260] sm:$0xff]
    %v150 = vld [vmem:[#allocation5 + $0x268] sm:$0xff]
    %v151 = vld [vmem:[#allocation5 + $0x270] sm:$0xff]
    %v152 = vld [vmem:[#allocation5 + $0x278] sm:$0xff]
    %v153 = vld [vmem:[#allocation5 + $0x280] sm:$0xff]
    %v154 = vld [vmem:[#allocation5 + $0x288] sm:$0xff]
    %v155 = vld [vmem:[#allocation5 + $0x290] sm:$0xff]
    %v156 = vld [vmem:[#allocation5 + $0x298] sm:$0xff]
    %v157 = vld [vmem:[#allocation5 + $0x2a0] sm:$0xff]
    %v158 = vld [vmem:[#allocation5 + $0x2a8] sm:$0xff]
    %v159 = vld [vmem:[#allocation5 + $0x2b0] sm:$0xff]
    %v160 = vld [vmem:[#allocation5 + $0x2b8] sm:$0xff]
    %v161 = vld [vmem:[#allocation5 + $0x2c0] sm:$0xff]
    %v162 = vld [vmem:[#allocation5 + $0x2c8] sm:$0xff]
    %v163 = vld [vmem:[#allocation5 + $0x2d0] sm:$0xff]
    %v164 = vld [vmem:[#allocation5 + $0x2d8] sm:$0xff]
    %v165 = vld [vmem:[#allocation5 + $0x2e0] sm:$0xff]
    %v166 = vld [vmem:[#allocation5 + $0x2e8] sm:$0xff]
    %v167 = vld [vmem:[#allocation5 + $0x2f0] sm:$0xff]
    %v168 = vld [vmem:[#allocation5 + $0x2f8] sm:$0xff]
    %v169 = vld [vmem:[#allocation5 + $0x300] sm:$0xff]
    %v170 = vld [vmem:[#allocation5 + $0x308] sm:$0xff]
    %v171 = vld [vmem:[#allocation5 + $0x310] sm:$0xff]
    %v172 = vld [vmem:[#allocation5 + $0x318] sm:$0xff]
    %v173 = vld [vmem:[#allocation5 + $0x320] sm:$0xff]
    %v174 = vld [vmem:[#allocation5 + $0x328] sm:$0xff]
    %v175 = vld [vmem:[#allocation5 + $0x330] sm:$0xff]
    %v176 = vld [vmem:[#allocation5 + $0x338] sm:$0xff]
    %v177 = vld [vmem:[#allocation5 + $0x340] sm:$0xff]
    %v178 = vld [vmem:[#allocation5 + $0x348] sm:$0xff]
    %v179 = vld [vmem:[#allocation5 + $0x350] sm:$0xff]
    %v180 = vld [vmem:[#allocation5 + $0x358] sm:$0xff]
    %v181 = vld [vmem:[#allocation5 + $0x360] sm:$0xff]
    %v182 = vld [vmem:[#allocation5 + $0x368] sm:$0xff]
    %v183 = vld [vmem:[#allocation5 + $0x370] sm:$0xff]
    %v184 = vld [vmem:[#allocation5 + $0x378] sm:$0xff]
    %v185 = vld [vmem:[%s2] sm:$0x1]
    %v187 = vperm.slane %v185, 0
    %189 = vmatpush.msra.mxu0 %v88
    %190 = vmatpush.msra.mxu0 %v87
    %191 = vmatpush.msra.mxu0 %v86
    %192 = vmatpush.msra.mxu0 %v85
    %193 = vmatpush.msra.mxu0 %v84
    %194 = vmatpush.msra.mxu0 %v83
    %195 = vmatpush.msra.mxu0 %v82
    %196 = vmatpush.msra.mxu0 %v81
    %197 = vmatpush.msra.mxu0 %v80
    %198 = vmatpush.msra.mxu0 %v79
    %199 = vmatpush.msra.mxu0 %v78
    %200 = vmatpush.msra.mxu0 %v77
    %201 = vmatpush.msra.mxu0 %v76
    %202 = vmatpush.msra.mxu0 %v75
    %203 = vmatpush.msra.mxu0 %v74
    %204 = vmatpush.msra.mxu0 %v73
    %205 = vmatmul.f32.gmra.mxu0 %v66
    %v206 = vpop.f32.mrf.mxu0
    %v207 = vadd.f32 %v187, %v206
    %208 = vdwg.mxu0
    %209 = vmatpush.msra.mxu0 %v104
    %210 = vmatpush.msra.mxu0 %v103
    %211 = vmatpush.msra.mxu0 %v102
    %212 = vmatpush.msra.mxu0 %v101
    %213 = vmatpush.msra.mxu0 %v100
    %214 = vmatpush.msra.mxu0 %v99
    %215 = vmatpush.msra.mxu0 %v98
    %216 = vmatpush.msra.mxu0 %v97
    %217 = vmatpush.msra.mxu0 %v96
    %218 = vmatpush.msra.mxu0 %v95
    %219 = vmatpush.msra.mxu0 %v94
    %220 = vmatpush.msra.mxu0 %v93
    %221 = vmatpush.msra.mxu0 %v92
    %222 = vmatpush.msra.mxu0 %v91
    %223 = vmatpush.msra.mxu0 %v90
    %224 = vmatpush.msra.mxu0 %v89
    %225 = vmatmul.f32.gmra.mxu0 %v67
    %v226 = vpop.f32.mrf.mxu0
    %v227 = vadd.f32 %v207, %v226
    %228 = vdwg.mxu0
    %229 = vmatpush.msra.mxu0 %v120
    %230 = vmatpush.msra.mxu0 %v119
    %231 = vmatpush.msra.mxu0 %v118
    %232 = vmatpush.msra.mxu0 %v117
    %233 = vmatpush.msra.mxu0 %v116
    %234 = vmatpush.msra.mxu0 %v115
    %235 = vmatpush.msra.mxu0 %v114
    %236 = vmatpush.msra.mxu0 %v113
    %237 = vmatpush.msra.mxu0 %v112
    %238 = vmatpush.msra.mxu0 %v111
    %239 = vmatpush.msra.mxu0 %v110
    %240 = vmatpush.msra.mxu0 %v109
    %241 = vmatpush.msra.mxu0 %v108
    %242 = vmatpush.msra.mxu0 %v107
    %243 = vmatpush.msra.mxu0 %v106
    %244 = vmatpush.msra.mxu0 %v105
    %245 = vmatmul.f32.gmra.mxu0 %v68
    %v246 = vpop.f32.mrf.mxu0
    %v247 = vadd.f32 %v227, %v246
    %248 = vdwg.mxu0
    %249 = vmatpush.msra.mxu0 %v136
    %250 = vmatpush.msra.mxu0 %v135
    %251 = vmatpush.msra.mxu0 %v134
    %252 = vmatpush.msra.mxu0 %v133
    %253 = vmatpush.msra.mxu0 %v132
    %254 = vmatpush.msra.mxu0 %v131
    %255 = vmatpush.msra.mxu0 %v130
    %256 = vmatpush.msra.mxu0 %v129
    %257 = vmatpush.msra.mxu0 %v128
    %258 = vmatpush.msra.mxu0 %v127
    %259 = vmatpush.msra.mxu0 %v126
    %260 = vmatpush.msra.mxu0 %v125
    %261 = vmatpush.msra.mxu0 %v124
    %262 = vmatpush.msra.mxu0 %v123
    %263 = vmatpush.msra.mxu0 %v122
    %264 = vmatpush.msra.mxu0 %v121
    %265 = vmatmul.f32.gmra.mxu0 %v69
    %v266 = vpop.f32.mrf.mxu0
    %v267 = vadd.f32 %v247, %v266
    %268 = vdwg.mxu0
    %269 = vmatpush.msra.mxu0 %v152
    %270 = vmatpush.msra.mxu0 %v151
    %271 = vmatpush.msra.mxu0 %v150
    %272 = vmatpush.msra.mxu0 %v149
    %273 = vmatpush.msra.mxu0 %v148
    %274 = vmatpush.msra.mxu0 %v147
    %275 = vmatpush.msra.mxu0 %v146
    %276 = vmatpush.msra.mxu0 %v145
    %277 = vmatpush.msra.mxu0 %v144
    %278 = vmatpush.msra.mxu0 %v143
    %279 = vmatpush.msra.mxu0 %v142
    %280 = vmatpush.msra.mxu0 %v141
    %281 = vmatpush.msra.mxu0 %v140
    %282 = vmatpush.msra.mxu0 %v139
    %283 = vmatpush.msra.mxu0 %v138
    %284 = vmatpush.msra.mxu0 %v137
    %285 = vmatmul.f32.gmra.mxu0 %v70
    %v286 = vpop.f32.mrf.mxu0
    %v287 = vadd.f32 %v267, %v286
    %288 = vdwg.mxu0
    %289 = vmatpush.msra.mxu0 %v168
    %290 = vmatpush.msra.mxu0 %v167
    %291 = vmatpush.msra.mxu0 %v166
    %292 = vmatpush.msra.mxu0 %v165
    %293 = vmatpush.msra.mxu0 %v164
    %294 = vmatpush.msra.mxu0 %v163
    %295 = vmatpush.msra.mxu0 %v162
    %296 = vmatpush.msra.mxu0 %v161
    %297 = vmatpush.msra.mxu0 %v160
    %298 = vmatpush.msra.mxu0 %v159
    %299 = vmatpush.msra.mxu0 %v158
    %300 = vmatpush.msra.mxu0 %v157
    %301 = vmatpush.msra.mxu0 %v156
    %302 = vmatpush.msra.mxu0 %v155
    %303 = vmatpush.msra.mxu0 %v154
    %304 = vmatpush.msra.mxu0 %v153
    %305 = vmatmul.f32.gmra.mxu0 %v71
    %v306 = vpop.f32.mrf.mxu0
    %v307 = vadd.f32 %v287, %v306
    %308 = vdwg.mxu0
    %309 = vmatpush.msra.mxu0 %v184
    %310 = vmatpush.msra.mxu0 %v183
    %311 = vmatpush.msra.mxu0 %v182
    %312 = vmatpush.msra.mxu0 %v181
    %313 = vmatpush.msra.mxu0 %v180
    %314 = vmatpush.msra.mxu0 %v179
    %315 = vmatpush.msra.mxu0 %v178
    %316 = vmatpush.msra.mxu0 %v177
    %317 = vmatpush.msra.mxu0 %v176
    %318 = vmatpush.msra.mxu0 %v175
    %319 = vmatpush.msra.mxu0 %v174
    %320 = vmatpush.msra.mxu0 %v173
    %321 = vmatpush.msra.mxu0 %v172
    %322 = vmatpush.msra.mxu0 %v171
    %323 = vmatpush.msra.mxu0 %v170
    %324 = vmatpush.msra.mxu0 %v169
    %325 = vmatmul.f32.gmra.mxu0 %v72
    %v326 = vpop.f32.mrf.mxu0
    %v327 = vadd.f32 %v307, %v326
    %328 = vdwg.mxu0
    %v329 = vmax.f32 %v327, 0.0
    %v330 = vld [vmem:[#allocation7] sm:$0xff]
    %v331 = vld [vmem:[#allocation7 + $0x8] sm:$0xff]
    %v332 = vld [vmem:[#allocation7 + $0x10] sm:$0xff]
    %v333 = vld [vmem:[#allocation7 + $0x18] sm:$0xff]
    %v334 = vld [vmem:[#allocation7 + $0x20] sm:$0xff]
    %v335 = vld [vmem:[#allocation7 + $0x28] sm:$0xff]
    %v336 = vld [vmem:[#allocation7 + $0x30] sm:$0xff]
    %v337 = vld [vmem:[#allocation7 + $0x38] sm:$0xff]
    %v338 = vld [vmem:[#allocation7 + $0x40] sm:$0xff]
    %v339 = vld [vmem:[#allocation7 + $0x48] sm:$0xff]
    %v340 = vld [vmem:[#allocation7 + $0x50] sm:$0xff]
    %v341 = vld [vmem:[#allocation7 + $0x58] sm:$0xff]
    %v342 = vld [vmem:[#allocation7 + $0x60] sm:$0xff]
    %v343 = vld [vmem:[#allocation7 + $0x68] sm:$0xff]
    %v344 = vld [vmem:[#allocation7 + $0x70] sm:$0xff]
    %v345 = vld [vmem:[#allocation7 + $0x78] sm:$0xff]
    %v346 = vld [vmem:[%s4] sm:$0x1]
    %v348 = vperm.slane %v346, 0
    %350 = vmatpush.msra.mxu0 %v345
    %351 = vmatpush.msra.mxu0 %v344
    %352 = vmatpush.msra.mxu0 %v343
    %353 = vmatpush.msra.mxu0 %v342
    %354 = vmatpush.msra.mxu0 %v341
    %355 = vmatpush.msra.mxu0 %v340
    %356 = vmatpush.msra.mxu0 %v339
    %357 = vmatpush.msra.mxu0 %v338
    %358 = vmatpush.msra.mxu0 %v337
    %359 = vmatpush.msra.mxu0 %v336
    %360 = vmatpush.msra.mxu0 %v335
    %361 = vmatpush.msra.mxu0 %v334
    %362 = vmatpush.msra.mxu0 %v333
    %363 = vmatpush.msra.mxu0 %v332
    %364 = vmatpush.msra.mxu0 %v331
    %365 = vmatpush.msra.mxu0 %v330
    %366 = vmatmul.f32.gmra.mxu0 %v329
    %v367 = vpop.f32.mrf.mxu0
    %v368 = vadd.f32 %v348, %v367
    %369 = vdwg.mxu0
    %370 = vst [vmem:[#allocation8] sm:$0xff] %v368
    // Predicated region
    $region34: #{tpu_custom_call.1} parent=1 // pred_check
      _
    $region35: #{tpu_custom_call.1} parent=1 // pred_check_branch
      %372 = sbr.rel (0) target = $region37
    $region36: #{tpu_custom_call.1} parent=1 // pred_region
      %374 = vsyncadd [#allocation4], 0
      %s376 = sshll.u32 [#allocation8], 4
      %s377 = int_to_ptr.vmem [resolvable:$true] %s376
      %s378 = sshll.u32 %s5, 4
      %s379 = int_to_ptr.hbm [resolvable:$true] %s378
      %381 = dma.vmem_to_hbm [thread:$0]  %s377, 128, %s379, [#allocation4]
    $region37: #{tpu_custom_call.1} parent=1 // pred_fallthru
      _
    // Predicated region
    $region38: #{tpu_custom_call.1} parent=1 // pred_check
      _
    $region39: #{tpu_custom_call.1} parent=1 // pred_check_branch
      %383 = sbr.rel (0) target = $region41
    $region40: #{tpu_custom_call.1} parent=1 // pred_region
      %385 = dma.done [#allocation4], 128
    $region41: #{tpu_custom_call.1} parent=1 // pred_fallthru
      _
    %386 = vsyncpa [#allocation3], 1
    %387 = vsyncpa [#allocation6], 1
    %388 = vsyncpa [#allocation4], 1

</llo_original>
